<compile_context>
chip_gen: v7x
topology: tpu7x:2x2x1
jax: 0.10.0
libtpu: 0.0.40
codegen_flags: <defaults>
</compile_context>

<pallas_src>
import numpy as np
import jax
import jax.numpy as jnp
from jax.experimental import pallas as pl
from jax.experimental.pallas import tpu as pltpu


# ---------------------------------------------------------------------------
# Pallas kernel: two matmuls = separable clipped box sum for TB planes
# ---------------------------------------------------------------------------
def _box_filter_kernel(x_ref, bhk_ref, bw_ref, o_ref):
    # x_ref  : (TB*H, W)      row slab of TB batch planes
    # bhk_ref: (TB*H, TB*H)   kron(I_TB, Bh) block-diagonal H-pass matrix
    # bw_ref : (W, W)         symmetric W-pass band matrix
    u = jnp.dot(x_ref[...], bw_ref[...], preferred_element_type=jnp.float32)
    o_ref[...] = jnp.dot(bhk_ref[...], u, preferred_element_type=jnp.float32)


def _band_matrix(n, r):
    """0/1 matrix M[i, k] = 1 iff |i - k| <= r (clipped box-sum operator)."""
    idx = np.arange(n)
    return (np.abs(idx[:, None] - idx[None, :]) <= r).astype(np.float32)


def _pick_tb(B, H, max_rows=512):
    """Largest divisor TB of B with a layout-legal (TB*H, W) block."""
    for tb in range(B, 0, -1):
        if B % tb:
            continue
        rows = tb * H
        if rows > max_rows:
            continue
        if rows % 8 != 0 and tb != B:   # (8,128) sublane rule (or full extent)
            continue
        return tb
    # H alone exceeds max_rows: one plane per step if layout-legal, else full.
    return 1 if (H % 8 == 0 or B == 1) else B


def box_filter(x, kernel_size=None, radius=None):
    """Pallas forward pass matching BoxFilter.forward (NCHW, float32)."""
    assert kernel_size is not None and radius is not None
    r = int((kernel_size - 1) / 2)          # mirrors the torch __init__ logic

    x = x.astype(jnp.float32)
    N, C, H, W = x.shape
    B = N * C
    TB = _pick_tb(B, H)

    bh = _band_matrix(H, r)
    bhk = jnp.asarray(np.kron(np.eye(TB, dtype=np.float32), bh))  # (TB*H, TB*H)
    bw = jnp.asarray(_band_matrix(W, r))                          # (W, W), symm.

    x2 = x.reshape(B * H, W)                # free, row-major reshape
    rows = TB * H

    out = pl.pallas_call(
        _box_filter_kernel,
        out_shape=jax.ShapeDtypeStruct((B * H, W), jnp.float32),
        grid=(B // TB,),
        in_specs=[
            pl.BlockSpec((rows, W), lambda i: (i, 0)),
            pl.BlockSpec((rows, rows), lambda i: (0, 0)),
            pl.BlockSpec((W, W), lambda i: (0, 0)),
        ],
        out_specs=pl.BlockSpec((rows, W), lambda i: (i, 0)),
        compiler_params=pltpu.CompilerParams(
            dimension_semantics=("parallel",),
            vmem_limit_bytes=32 * 1024 * 1024),
    )(x2, bhk, bw)

    return out.reshape(N, C, H, W)


# ---------------------------------------------------------------------------
# Pure-JAX reference mirroring the PyTorch cumsum + diff_x/diff_y formulation
# ---------------------------------------------------------------------------
def _diff_along(c, r, axis):
    n = c.shape[axis]

    def sl(a, start, stop):
        return jax.lax.slice_in_dim(a, start, stop, axis=axis)

    left = sl(c, r, 2 * r + 1)
    middle = sl(c, 2 * r + 1, n) - sl(c, 0, n - 2 * r - 1)
    right = sl(c, n - 1, n) - sl(c, n - 2 * r - 1, n - r - 1)
    return jnp.concatenate([left, middle, right], axis=axis)


def reference_box_filter(x, kernel_size):
    r = (kernel_size - 1) // 2
    y = _diff_along(jnp.cumsum(x, axis=2), r, axis=2)
    return _diff_along(jnp.cumsum(y, axis=3), r, axis=3)


# ---------------------------------------------------------------------------
if __name__ == "__main__":
    key = jax.random.PRNGKey(0)
    x = jax.random.uniform(key, (2, 4, 16, 16), dtype=jnp.float32)

    for ks in (3, 9):                      # radius 1 and radius 4
        rad = (ks - 1) // 2
        y = jax.block_until_ready(box_filter(x, kernel_size=ks, radius=rad))
        y_ref = jax.block_until_ready(reference_box_filter(x, ks))
        assert y.shape == x.shape
        np.testing.assert_allclose(np.asarray(y), np.asarray(y_ref),
                                   rtol=1e-4, atol=1e-4)

    print("KERNEL_OK")
</pallas_src>

<mosaic_0001>
module attributes {stable_mosaic.version = 11 : i64} {
  func.func @_box_filter_kernel(%arg0: i32, %arg1: memref<128x16xf32, #tpu.memory_space<vmem>>, %arg2: memref<128x128xf32, #tpu.memory_space<vmem>>, %arg3: memref<16x16xf32, #tpu.memory_space<vmem>>, %arg4: memref<128x16xf32, #tpu.memory_space<vmem>>) attributes {dimension_semantics = [#tpu.dimension_semantics<parallel>], iteration_bounds = array<i64: 1>, scalar_prefetch = 0 : i64, scratch_operands = 0 : i64, tpu.core_type = #tpu.core_type<tc>, window_params = [{transform_indices = @transform_0, window_bounds = array<i64: 128, 16>}, {pipeline_mode = #tpu.pipeline_mode<synchronous>, transform_indices = @transform_1, window_bounds = array<i64: 128, 128>}, {pipeline_mode = #tpu.pipeline_mode<synchronous>, transform_indices = @transform_2, window_bounds = array<i64: 16, 16>}, {transform_indices = @transform_3, window_bounds = array<i64: 128, 16>}]} {
    %c0 = arith.constant 0 : index
    %c0_0 = arith.constant 0 : index
    %0 = vector.load %arg1[%c0, %c0_0] : memref<128x16xf32, #tpu.memory_space<vmem>>, vector<128x16xf32>
    %c0_1 = arith.constant 0 : index
    %c0_2 = arith.constant 0 : index
    %1 = vector.load %arg3[%c0_1, %c0_2] : memref<16x16xf32, #tpu.memory_space<vmem>>, vector<16x16xf32>
    %cst = arith.constant dense<0.000000e+00> : vector<128x16xf32>
    %2 = tpu.matmul %0, %1, %cst {dimension_numbers = #tpu.dot_dimension_numbers<[1], [0], [0], [1], [0, 0, 1, 1], [], []>} : vector<128x16xf32>, vector<16x16xf32>, vector<128x16xf32> -> vector<128x16xf32>
    %c0_3 = arith.constant 0 : index
    %c0_4 = arith.constant 0 : index
    %3 = vector.load %arg2[%c0_3, %c0_4] : memref<128x128xf32, #tpu.memory_space<vmem>>, vector<128x128xf32>
    %cst_5 = arith.constant dense<0.000000e+00> : vector<128x16xf32>
    %4 = tpu.matmul %3, %2, %cst_5 {dimension_numbers = #tpu.dot_dimension_numbers<[1], [0], [0], [1], [0, 0, 1, 1], [], []>} : vector<128x128xf32>, vector<128x16xf32>, vector<128x16xf32> -> vector<128x16xf32>
    %c0_6 = arith.constant 0 : index
    %c0_7 = arith.constant 0 : index
    %5 = vector.load %arg4[%c0_6, %c0_7] : memref<128x16xf32, #tpu.memory_space<vmem>>, vector<128x16xf32>
    tpu.vector_store %arg4[%c0_6, %c0_7], %4 {strides = array<i32>} : memref<128x16xf32, #tpu.memory_space<vmem>>, vector<128x16xf32>,
    return
  }
  func.func @transform_0(%arg0: i32) -> (i32, i32) {
    %c0_i32 = arith.constant 0 : i32
    %c0_i32_0 = arith.constant 0 : i32
    return %arg0, %c0_i32 : i32, i32
  }
  func.func @transform_1(%arg0: i32) -> (i32, i32) {
    %c0_i32 = arith.constant 0 : i32
    %c0_i32_0 = arith.constant 0 : i32
    %c0_i32_1 = arith.constant 0 : i32
    return %c0_i32, %c0_i32_0 : i32, i32
  }
  func.func @transform_2(%arg0: i32) -> (i32, i32) {
    %c0_i32 = arith.constant 0 : i32
    %c0_i32_0 = arith.constant 0 : i32
    %c0_i32_1 = arith.constant 0 : i32
    return %c0_i32, %c0_i32_0 : i32, i32
  }
  func.func @transform_3(%arg0: i32) -> (i32, i32) {
    %c0_i32 = arith.constant 0 : i32
    %c0_i32_0 = arith.constant 0 : i32
    return %arg0, %c0_i32 : i32, i32
  }
}

</mosaic_0001>

<llo_original>
// kernel: tpu_custom_call.1
$region0: #{tpu_custom_call.1}
  #allocation0 [shape = 'u32[]', space=smem, size = 0x4, offset = 0x4, fixed_abs, tag = 'smem constant byte address 0x4 - core index']
  #allocation1 [shape = 'u32[144,128]{1,0:T(1,128)}', space=vmem, size = 0x12000, scoped, tag = 'internal scratch']
  %s0 = inlined_call_operand.vmem [shape: f32[128,16], index: 0, kind: input, shape index: {}]
  %s1 = inlined_call_operand.vmem [shape: f32[128,128], index: 1, kind: input, shape index: {}]
  %s2 = inlined_call_operand.vmem [shape: f32[16,16], index: 2, kind: input, shape index: {}]
  %s3 = inlined_call_operand.vmem [shape: f32[128,16], index: 3, kind: output, shape index: {}]
  %s4 = sld [smem:[#allocation0]]
  $region22: #{tpu_custom_call.1} parent=0
    _
  %s6 = ssub.s32 1, %s4
  %s7 = scalar_select 0, %s6, %s4
  // Predicated region
  $region2: #{tpu_custom_call.1} parent=0 // pred_check
    _
  $region3: #{tpu_custom_call.1} parent=0 // pred_check_branch
    %9 = sbr.rel (0) target = $region5
  $region4: #{tpu_custom_call.1} parent=0 // pred_region
    _
  $region5: #{tpu_custom_call.1} parent=0 // pred_fallthru
    _
  // Predicated region
  $region6: #{tpu_custom_call.1} parent=0 // pred_check
    _
  $region7: #{tpu_custom_call.1} parent=0 // pred_check_branch
    %11 = sbr.rel (0) target = $region9
  $region8: #{tpu_custom_call.1} parent=0 // pred_region
    _
  $region9: #{tpu_custom_call.1} parent=0 // pred_fallthru
    _
  // Predicated region
  $region10: #{tpu_custom_call.1} parent=0 // pred_check
    _
  $region11: #{tpu_custom_call.1} parent=0 // pred_check_branch
    %13 = sbr.rel (0) target = $region13
  $region12: #{tpu_custom_call.1} parent=0 // pred_region
    _
  $region13: #{tpu_custom_call.1} parent=0 // pred_fallthru
    _
  %v14 = vld [vmem:[%s0] sm:$0xff]
  %v15 = vld [vmem:[%s0 + $0x8] sm:$0xff]
  %v16 = vld [vmem:[%s0 + $0x10] sm:$0xff]
  %v17 = vld [vmem:[%s0 + $0x18] sm:$0xff]
  %v18 = vld [vmem:[%s0 + $0x20] sm:$0xff]
  %v19 = vld [vmem:[%s0 + $0x28] sm:$0xff]
  %v20 = vld [vmem:[%s0 + $0x30] sm:$0xff]
  %v21 = vld [vmem:[%s0 + $0x38] sm:$0xff]
  %v22 = vld [vmem:[%s0 + $0x40] sm:$0xff]
  %v23 = vld [vmem:[%s0 + $0x48] sm:$0xff]
  %v24 = vld [vmem:[%s0 + $0x50] sm:$0xff]
  %v25 = vld [vmem:[%s0 + $0x58] sm:$0xff]
  %v26 = vld [vmem:[%s0 + $0x60] sm:$0xff]
  %v27 = vld [vmem:[%s0 + $0x68] sm:$0xff]
  %v28 = vld [vmem:[%s0 + $0x70] sm:$0xff]
  %v29 = vld [vmem:[%s0 + $0x78] sm:$0xff]
  %v30 = vld [vmem:[%s2] sm:$0xff]
  %v31 = vld [vmem:[%s2 + $0x8] sm:$0xff]
  %vm32 = vcmask 130048
  %v34 = vsel %vm32, %v14, 0
  %v37 = vsel %vm32, %v15, 0
  %v40 = vsel %vm32, %v16, 0
  %v43 = vsel %vm32, %v17, 0
  %v46 = vsel %vm32, %v18, 0
  %v49 = vsel %vm32, %v19, 0
  %v52 = vsel %vm32, %v20, 0
  %v55 = vsel %vm32, %v21, 0
  %v58 = vsel %vm32, %v22, 0
  %v61 = vsel %vm32, %v23, 0
  %v64 = vsel %vm32, %v24, 0
  %v67 = vsel %vm32, %v25, 0
  %v70 = vsel %vm32, %v26, 0
  %v73 = vsel %vm32, %v27, 0
  %v76 = vsel %vm32, %v28, 0
  %v79 = vsel %vm32, %v29, 0
  %81 = vmatprep.subr.mxu0 0.0
  %82 = vmatpush1.msra.mxu0 %v30
  %83 = vmatprep.subr.mxu0 0.0
  %84 = vmatpush1.msra.mxu0 %v31
  %85 = vmatprep.subr.mxu0 0.0
  %86 = vmatpush1.msra.mxu0 0.0
  %87 = vmatprep.subr.mxu0 0.0
  %88 = vmatpush1.msra.mxu0 0.0
  %89 = vmatprep.subr.mxu0 0.0
  %90 = vmatpush1.msra.mxu0 0.0
  %91 = vmatprep.subr.mxu0 0.0
  %92 = vmatpush1.msra.mxu0 0.0
  %93 = vmatprep.subr.mxu0 0.0
  %94 = vmatpush1.msra.mxu0 0.0
  %95 = vmatprep.subr.mxu0 0.0
  %96 = vmatpush1.msra.mxu0 0.0
  %97 = vmatprep.subr.mxu0 0.0
  %98 = vmatpush1.msra.mxu0 0.0
  %99 = vmatprep.subr.mxu0 0.0
  %100 = vmatpush1.msra.mxu0 0.0
  %101 = vmatprep.subr.mxu0 0.0
  %102 = vmatpush1.msra.mxu0 0.0
  %103 = vmatprep.subr.mxu0 0.0
  %104 = vmatpush1.msra.mxu0 0.0
  %105 = vmatprep.subr.mxu0 0.0
  %106 = vmatpush1.msra.mxu0 0.0
  %107 = vmatprep.subr.mxu0 0.0
  %108 = vmatpush1.msra.mxu0 0.0
  %109 = vmatprep.subr.mxu0 0.0
  %110 = vmatpush1.msra.mxu0 0.0
  %111 = vmatprep.subr.mxu0 0.0
  %112 = vmatpush1.msra.mxu0 0.0
  %113 = vmatprep.subr.mxu0 0.0
  %114 = vmatpush1.msra.mxu0 0.0
  %115 = vmatprep.subr.mxu0 0.0
  %116 = vmatpush1.msra.mxu0 0.0
  %117 = vmatprep.subr.mxu0 0.0
  %118 = vmatpush1.msra.mxu0 0.0
  %119 = vmatprep.subr.mxu0 0.0
  %120 = vmatpush1.msra.mxu0 0.0
  %121 = vmatprep.subr.mxu0 0.0
  %122 = vmatpush1.msra.mxu0 0.0
  %123 = vmatprep.subr.mxu0 0.0
  %124 = vmatpush1.msra.mxu0 0.0
  %125 = vmatprep.subr.mxu0 0.0
  %126 = vmatpush1.msra.mxu0 0.0
  %127 = vmatprep.subr.mxu0 0.0
  %128 = vmatpush1.msra.mxu0 0.0
  %129 = vmatprep.subr.mxu0 0.0
  %130 = vmatpush1.msra.mxu0 0.0
  %131 = vmatprep.subr.mxu0 0.0
  %132 = vmatpush1.msra.mxu0 0.0
  %133 = vmatprep.subr.mxu0 0.0
  %134 = vmatpush1.msra.mxu0 0.0
  %135 = vmatprep.subr.mxu0 0.0
  %136 = vmatpush1.msra.mxu0 0.0
  %137 = vmatprep.subr.mxu0 0.0
  %138 = vmatpush1.msra.mxu0 0.0
  %139 = vmatprep.subr.mxu0 0.0
  %140 = vmatpush1.msra.mxu0 0.0
  %141 = vmatprep.subr.mxu0 0.0
  %142 = vmatpush1.msra.mxu0 0.0
  %143 = vmatprep.subr.mxu0 0.0
  %144 = vmatpush1.msra.mxu0 0.0
  %145 = vmatprep.mubr.f32.mxu0 0.0
  %146 = vmatmul.mubr.f32.gmra.mrb[0].mxu0 %v34
  %v147 = vpop.f32.mrb[0].mxu0
  %v148 = vadd.f32 0.0, %v147
  %v149 = vpop.f32.mrb[0].mxu0
  %150 = vmatprep.mubr.f32.mxu0 0.0
  %151 = vmatmul.mubr.f32.gmra.mrb[0].mxu0 %v37
  %v152 = vpop.f32.mrb[0].mxu0
  %v153 = vadd.f32 0.0, %v152
  %v154 = vpop.f32.mrb[0].mxu0
  %155 = vmatprep.mubr.f32.mxu0 0.0
  %156 = vmatmul.mubr.f32.gmra.mrb[0].mxu0 %v40
  %v157 = vpop.f32.mrb[0].mxu0
  %v158 = vadd.f32 0.0, %v157
  %v159 = vpop.f32.mrb[0].mxu0
  %160 = vmatprep.mubr.f32.mxu0 0.0
  %161 = vmatmul.mubr.f32.gmra.mrb[0].mxu0 %v43
  %v162 = vpop.f32.mrb[0].mxu0
  %v163 = vadd.f32 0.0, %v162
  %v164 = vpop.f32.mrb[0].mxu0
  %165 = vmatprep.mubr.f32.mxu0 0.0
  %166 = vmatmul.mubr.f32.gmra.mrb[0].mxu0 %v46
  %v167 = vpop.f32.mrb[0].mxu0
  %v168 = vadd.f32 0.0, %v167
  %v169 = vpop.f32.mrb[0].mxu0
  %170 = vmatprep.mubr.f32.mxu0 0.0
  %171 = vmatmul.mubr.f32.gmra.mrb[0].mxu0 %v49
  %v172 = vpop.f32.mrb[0].mxu0
  %v173 = vadd.f32 0.0, %v172
  %v174 = vpop.f32.mrb[0].mxu0
  %175 = vmatprep.mubr.f32.mxu0 0.0
  %176 = vmatmul.mubr.f32.gmra.mrb[0].mxu0 %v52
  %v177 = vpop.f32.mrb[0].mxu0
  %v178 = vadd.f32 0.0, %v177
  %v179 = vpop.f32.mrb[0].mxu0
  %180 = vmatprep.mubr.f32.mxu0 0.0
  %181 = vmatmul.mubr.f32.gmra.mrb[0].mxu0 %v55
  %v182 = vpop.f32.mrb[0].mxu0
  %v183 = vadd.f32 0.0, %v182
  %v184 = vpop.f32.mrb[0].mxu0
  %185 = vmatprep.mubr.f32.mxu0 0.0
  %186 = vmatmul.mubr.f32.gmra.mrb[0].mxu0 %v58
  %v187 = vpop.f32.mrb[0].mxu0
  %v188 = vadd.f32 0.0, %v187
  %v189 = vpop.f32.mrb[0].mxu0
  %190 = vmatprep.mubr.f32.mxu0 0.0
  %191 = vmatmul.mubr.f32.gmra.mrb[0].mxu0 %v61
  %v192 = vpop.f32.mrb[0].mxu0
  %v193 = vadd.f32 0.0, %v192
  %v194 = vpop.f32.mrb[0].mxu0
  %195 = vmatprep.mubr.f32.mxu0 0.0
  %196 = vmatmul.mubr.f32.gmra.mrb[0].mxu0 %v64
  %v197 = vpop.f32.mrb[0].mxu0
  %v198 = vadd.f32 0.0, %v197
  %v199 = vpop.f32.mrb[0].mxu0
  %200 = vmatprep.mubr.f32.mxu0 0.0
  %201 = vmatmul.mubr.f32.gmra.mrb[0].mxu0 %v67
  %v202 = vpop.f32.mrb[0].mxu0
  %v203 = vadd.f32 0.0, %v202
  %v204 = vpop.f32.mrb[0].mxu0
  %205 = vmatprep.mubr.f32.mxu0 0.0
  %206 = vmatmul.mubr.f32.gmra.mrb[0].mxu0 %v70
  %v207 = vpop.f32.mrb[0].mxu0
  %v208 = vadd.f32 0.0, %v207
  %v209 = vpop.f32.mrb[0].mxu0
  %210 = vmatprep.mubr.f32.mxu0 0.0
  %211 = vmatmul.mubr.f32.gmra.mrb[0].mxu0 %v73
  %v212 = vpop.f32.mrb[0].mxu0
  %v213 = vadd.f32 0.0, %v212
  %v214 = vpop.f32.mrb[0].mxu0
  %215 = vmatprep.mubr.f32.mxu0 0.0
  %216 = vmatmul.mubr.f32.gmra.mrb[0].mxu0 %v76
  %v217 = vpop.f32.mrb[0].mxu0
  %v218 = vadd.f32 0.0, %v217
  %v219 = vpop.f32.mrb[0].mxu0
  %220 = vmatprep.mubr.f32.mxu0 0.0
  %221 = vmatmul.mubr.f32.gmra.mrb[0].mxu0 %v79
  %v222 = vpop.f32.mrb[0].mxu0
  %v223 = vadd.f32 0.0, %v222
  %v224 = vpop.f32.mrb[0].mxu0
  %225 = vdwg.mxu0
  %v226 = vld [vmem:[%s1] sm:$0xff]
  %v227 = vld [vmem:[%s1 + $0x8] sm:$0xff]
  %v228 = vld [vmem:[%s1 + $0x10] sm:$0xff]
  %v229 = vld [vmem:[%s1 + $0x18] sm:$0xff]
  %v230 = vld [vmem:[%s1 + $0x20] sm:$0xff]
  %v231 = vld [vmem:[%s1 + $0x28] sm:$0xff]
  %v232 = vld [vmem:[%s1 + $0x30] sm:$0xff]
  %v233 = vld [vmem:[%s1 + $0x38] sm:$0xff]
  %v234 = vld [vmem:[%s1 + $0x40] sm:$0xff]
  %v235 = vld [vmem:[%s1 + $0x48] sm:$0xff]
  %v236 = vld [vmem:[%s1 + $0x50] sm:$0xff]
  %v237 = vld [vmem:[%s1 + $0x58] sm:$0xff]
  %v238 = vld [vmem:[%s1 + $0x60] sm:$0xff]
  %v239 = vld [vmem:[%s1 + $0x68] sm:$0xff]
  %v240 = vld [vmem:[%s1 + $0x70] sm:$0xff]
  %v241 = vld [vmem:[%s1 + $0x78] sm:$0xff]
  %242 = vmatprep.subr.mxu0 0.0
  %243 = vmatpush1.msra.mxu0 %v148
  %244 = vmatprep.subr.mxu0 0.0
  %245 = vmatpush1.msra.mxu0 %v153
  %246 = vmatprep.subr.mxu0 0.0
  %247 = vmatpush1.msra.mxu0 %v158
  %248 = vmatprep.subr.mxu0 0.0
  %249 = vmatpush1.msra.mxu0 %v163
  %250 = vmatprep.subr.mxu0 0.0
  %251 = vmatpush1.msra.mxu0 %v168
  %252 = vmatprep.subr.mxu0 0.0
  %253 = vmatpush1.msra.mxu0 %v173
  %254 = vmatprep.subr.mxu0 0.0
  %255 = vmatpush1.msra.mxu0 %v178
  %256 = vmatprep.subr.mxu0 0.0
  %257 = vmatpush1.msra.mxu0 %v183
  %258 = vmatprep.subr.mxu0 0.0
  %259 = vmatpush1.msra.mxu0 %v188
  %260 = vmatprep.subr.mxu0 0.0
  %261 = vmatpush1.msra.mxu0 %v193
  %262 = vmatprep.subr.mxu0 0.0
  %263 = vmatpush1.msra.mxu0 %v198
  %264 = vmatprep.subr.mxu0 0.0
  %265 = vmatpush1.msra.mxu0 %v203
  %266 = vmatprep.subr.mxu0 0.0
  %267 = vmatpush1.msra.mxu0 %v208
  %268 = vmatprep.subr.mxu0 0.0
  %269 = vmatpush1.msra.mxu0 %v213
  %270 = vmatprep.subr.mxu0 0.0
  %271 = vmatpush1.msra.mxu0 %v218
  %272 = vmatprep.subr.mxu0 0.0
  %273 = vmatpush1.msra.mxu0 %v223
  %274 = vmatprep.subr.mxu0 0.0
  %275 = vmatpush1.msra.mxu0 0.0
  %276 = vmatprep.subr.mxu0 0.0
  %277 = vmatpush1.msra.mxu0 0.0
  %278 = vmatprep.subr.mxu0 0.0
  %279 = vmatpush1.msra.mxu0 0.0
  %280 = vmatprep.subr.mxu0 0.0
  %281 = vmatpush1.msra.mxu0 0.0
  %282 = vmatprep.subr.mxu0 0.0
  %283 = vmatpush1.msra.mxu0 0.0
  %284 = vmatprep.subr.mxu0 0.0
  %285 = vmatpush1.msra.mxu0 0.0
  %286 = vmatprep.subr.mxu0 0.0
  %287 = vmatpush1.msra.mxu0 0.0
  %288 = vmatprep.subr.mxu0 0.0
  %289 = vmatpush1.msra.mxu0 0.0
  %290 = vmatprep.subr.mxu0 0.0
  %291 = vmatpush1.msra.mxu0 0.0
  %292 = vmatprep.subr.mxu0 0.0
  %293 = vmatpush1.msra.mxu0 0.0
  %294 = vmatprep.subr.mxu0 0.0
  %295 = vmatpush1.msra.mxu0 0.0
  %296 = vmatprep.subr.mxu0 0.0
  %297 = vmatpush1.msra.mxu0 0.0
  %298 = vmatprep.subr.mxu0 0.0
  %299 = vmatpush1.msra.mxu0 0.0
  %300 = vmatprep.subr.mxu0 0.0
  %301 = vmatpush1.msra.mxu0 0.0
  %302 = vmatprep.subr.mxu0 0.0
  %303 = vmatpush1.msra.mxu0 0.0
  %304 = vmatprep.subr.mxu0 0.0
  %305 = vmatpush1.msra.mxu0 0.0
  %306 = vmatprep.mubr.f32.mxu0 0.0
  %307 = vmatmul.mubr.f32.gmra.mrb[0].mxu0 %v226
  %v308 = vpop.f32.mrb[0].mxu0
  %v309 = vadd.f32 0.0, %v308
  %v310 = vpop.f32.mrb[0].mxu0
  %311 = vmatprep.mubr.f32.mxu0 0.0
  %312 = vmatmul.mubr.f32.gmra.mrb[0].mxu0 %v227
  %v313 = vpop.f32.mrb[0].mxu0
  %v314 = vadd.f32 0.0, %v313
  %v315 = vpop.f32.mrb[0].mxu0
  %316 = vmatprep.mubr.f32.mxu0 0.0
  %317 = vmatmul.mubr.f32.gmra.mrb[0].mxu0 %v228
  %v318 = vpop.f32.mrb[0].mxu0
  %v319 = vadd.f32 0.0, %v318
  %v320 = vpop.f32.mrb[0].mxu0
  %321 = vmatprep.mubr.f32.mxu0 0.0
  %322 = vmatmul.mubr.f32.gmra.mrb[0].mxu0 %v229
  %v323 = vpop.f32.mrb[0].mxu0
  %v324 = vadd.f32 0.0, %v323
  %v325 = vpop.f32.mrb[0].mxu0
  %326 = vmatprep.mubr.f32.mxu0 0.0
  %327 = vmatmul.mubr.f32.gmra.mrb[0].mxu0 %v230
  %v328 = vpop.f32.mrb[0].mxu0
  %v329 = vadd.f32 0.0, %v328
  %v330 = vpop.f32.mrb[0].mxu0
  %331 = vmatprep.mubr.f32.mxu0 0.0
  %332 = vmatmul.mubr.f32.gmra.mrb[0].mxu0 %v231
  %v333 = vpop.f32.mrb[0].mxu0
  %v334 = vadd.f32 0.0, %v333
  %v335 = vpop.f32.mrb[0].mxu0
  %336 = vmatprep.mubr.f32.mxu0 0.0
  %337 = vmatmul.mubr.f32.gmra.mrb[0].mxu0 %v232
  %v338 = vpop.f32.mrb[0].mxu0
  %v339 = vadd.f32 0.0, %v338
  %v340 = vpop.f32.mrb[0].mxu0
  %341 = vmatprep.mubr.f32.mxu0 0.0
  %342 = vmatmul.mubr.f32.gmra.mrb[0].mxu0 %v233
  %v343 = vpop.f32.mrb[0].mxu0
  %v344 = vadd.f32 0.0, %v343
  %v345 = vpop.f32.mrb[0].mxu0
  %346 = vmatprep.mubr.f32.mxu0 0.0
  %347 = vmatmul.mubr.f32.gmra.mrb[0].mxu0 %v234
  %v348 = vpop.f32.mrb[0].mxu0
  %v349 = vadd.f32 0.0, %v348
  %v350 = vpop.f32.mrb[0].mxu0
  %351 = vmatprep.mubr.f32.mxu0 0.0
  %352 = vmatmul.mubr.f32.gmra.mrb[0].mxu0 %v235
  %v353 = vpop.f32.mrb[0].mxu0
  %v354 = vadd.f32 0.0, %v353
  %v355 = vpop.f32.mrb[0].mxu0
  %356 = vmatprep.mubr.f32.mxu0 0.0
  %357 = vmatmul.mubr.f32.gmra.mrb[0].mxu0 %v236
  %v358 = vpop.f32.mrb[0].mxu0
  %v359 = vadd.f32 0.0, %v358
  %v360 = vpop.f32.mrb[0].mxu0
  %361 = vmatprep.mubr.f32.mxu0 0.0
  %362 = vmatmul.mubr.f32.gmra.mrb[0].mxu0 %v237
  %v363 = vpop.f32.mrb[0].mxu0
  %v364 = vadd.f32 0.0, %v363
  %v365 = vpop.f32.mrb[0].mxu0
  %366 = vmatprep.mubr.f32.mxu0 0.0
  %367 = vmatmul.mubr.f32.gmra.mrb[0].mxu0 %v238
  %v368 = vpop.f32.mrb[0].mxu0
  %v369 = vadd.f32 0.0, %v368
  %v370 = vpop.f32.mrb[0].mxu0
  %371 = vmatprep.mubr.f32.mxu0 0.0
  %372 = vmatmul.mubr.f32.gmra.mrb[0].mxu0 %v239
  %v373 = vpop.f32.mrb[0].mxu0
  %v374 = vadd.f32 0.0, %v373
  %v375 = vpop.f32.mrb[0].mxu0
  %376 = vmatprep.mubr.f32.mxu0 0.0
  %377 = vmatmul.mubr.f32.gmra.mrb[0].mxu0 %v240
  %v378 = vpop.f32.mrb[0].mxu0
  %v379 = vadd.f32 0.0, %v378
  %v380 = vpop.f32.mrb[0].mxu0
  %381 = vmatprep.mubr.f32.mxu0 0.0
  %382 = vmatmul.mubr.f32.gmra.mrb[0].mxu0 %v241
  %v383 = vpop.f32.mrb[0].mxu0
  %v384 = vadd.f32 0.0, %v383
  %v385 = vpop.f32.mrb[0].mxu0
  %386 = vdwg.mxu0
  %387 = vst.msk [vmem:[%s3] sm:$0xff] %vm32, %v309
  %388 = vst.msk [vmem:[%s3 + $0x8] sm:$0xff] %vm32, %v314
  %389 = vst.msk [vmem:[%s3 + $0x10] sm:$0xff] %vm32, %v319
  %390 = vst.msk [vmem:[%s3 + $0x18] sm:$0xff] %vm32, %v324
  %391 = vst.msk [vmem:[%s3 + $0x20] sm:$0xff] %vm32, %v329
  %392 = vst.msk [vmem:[%s3 + $0x28] sm:$0xff] %vm32, %v334
  %393 = vst.msk [vmem:[%s3 + $0x30] sm:$0xff] %vm32, %v339
  %394 = vst.msk [vmem:[%s3 + $0x38] sm:$0xff] %vm32, %v344
  %395 = vst.msk [vmem:[%s3 + $0x40] sm:$0xff] %vm32, %v349
  %396 = vst.msk [vmem:[%s3 + $0x48] sm:$0xff] %vm32, %v354
  %397 = vst.msk [vmem:[%s3 + $0x50] sm:$0xff] %vm32, %v359
  %398 = vst.msk [vmem:[%s3 + $0x58] sm:$0xff] %vm32, %v364
  %399 = vst.msk [vmem:[%s3 + $0x60] sm:$0xff] %vm32, %v369
  %400 = vst.msk [vmem:[%s3 + $0x68] sm:$0xff] %vm32, %v374
  %401 = vst.msk [vmem:[%s3 + $0x70] sm:$0xff] %vm32, %v379
  %402 = vst.msk [vmem:[%s3 + $0x78] sm:$0xff] %vm32, %v384
  // Predicated region
  $region14: #{tpu_custom_call.1} parent=0 // pred_check
    _
  $region15: #{tpu_custom_call.1} parent=0 // pred_check_branch
    %404 = sbr.rel (0) target = $region17
  $region16: #{tpu_custom_call.1} parent=0 // pred_region
    _
  $region17: #{tpu_custom_call.1} parent=0 // pred_fallthru
    _
  // Predicated region
  $region18: #{tpu_custom_call.1} parent=0 // pred_check
    _
  $region19: #{tpu_custom_call.1} parent=0 // pred_check_branch
    %406 = sbr.rel (0) target = $region21
  $region20: #{tpu_custom_call.1} parent=0 // pred_region
    _
  $region21: #{tpu_custom_call.1} parent=0 // pred_fallthru
    _

</llo_original>
